<compile_context>
chip_gen: v5e
topology: v5e:2x2
jax: 0.10.0
libtpu: 0.0.40
codegen_flags: <defaults>
</compile_context>

<pallas_src>
import math

import jax
import jax.numpy as jnp
from jax.experimental import pallas as pl
from jax.experimental.pallas import tpu as pltpu


def _transition_kernel(x_ref, w_ref, p2_ref, bn_ref, o_ref):
    # x_ref:  (Cin, TL)      flattened-spatial input chunk (TL = G*2W lanes)
    # w_ref:  (Cout, Cin)    1x1 conv weight, matmul dtype
    # p2_ref: (TL, TL//4)    block-diagonal 2x2 avg-pool matrix (0.25 entries)
    # bn_ref: (2, Cin, 1)    folded BN [scale; shift], f32
    # o_ref:  (Cout, TL//4)  flattened-spatial output chunk (lane dense)
    scale = bn_ref[0]                                   # (Cin, 1)
    shift = bn_ref[1]                                   # (Cin, 1)

    # Fused BN (inference) + ReLU, f32 on the VPU (safe on all generations).
    x = x_ref[...].astype(jnp.float32)                  # (Cin, TL)
    h = jnp.maximum(x * scale + shift, 0.0)

    mm = w_ref.dtype

    # 2x2 average pool of the whole chunk: ONE lane-dense MXU matmul.
    pooled = jnp.dot(h.astype(mm), p2_ref[...],
                     preferred_element_type=jnp.float32)        # (Cin, TL//4)

    # 1x1 conv as a channel matmul on the 4x-reduced activations.
    y = jnp.dot(w_ref[...], pooled.astype(mm),
                preferred_element_type=jnp.float32)             # (Cout, TL//4)

    o_ref[...] = y.astype(o_ref.dtype)


def _vmem_capacity_bytes():
    """Physical VMEM capacity, with a conservative fallback."""
    try:
        info = pltpu.get_tpu_info()
        cap = getattr(info, "vmem_capacity_bytes", None)
        if cap:
            return int(cap)
    except Exception:
        pass
    return 64 * 1024 * 1024  # v7x-sized conservative default


def _pick_lane_tile(hw, two_w, cin, itemsize, target_bytes):
    """Pick TL = lanes of flattened input per grid step.

    Constraints for a non-full tile:
      * TL divides H*W                        (even grid)
      * TL % (2W) == 0                        (chunk = whole output rows)
      * TL % 128 == 0 and (TL//4) % 128 == 0  (lane-dense in/out blocks)
        -> TL % 512 == 0
    Preference: smallest valid TL >= 1024 lanes under the byte budget (keeps
    the block-diagonal pool matmul cheap, gives >=2 spatial grid steps for
    megacore whenever the image allows it); fall back to the full image.
    """
    base = (512 * two_w) // math.gcd(512, two_w)          # lcm(512, 2W)
    cands = [t for t in range(base, hw, base) if hw % t == 0]
    if not cands:
        return hw
    cap_lanes = max(target_bytes // max(cin * itemsize, 1), base)
    good = [t for t in cands if 1024 <= t <= cap_lanes]
    if good:
        return min(good)
    fitting = [t for t in cands if t <= cap_lanes]
    if fitting:
        return max(fitting)
    return min(cands)


def transition_layer(x_nchw, conv_w, gamma, beta, running_mean, running_var,
                     eps=1e-5, compute_dtype=None, out_dtype=None):
    """x_nchw: (N, Cin, H, W).  conv_w: (Cout, Cin) or (Cout, Cin, 1, 1).
    Returns (N, Cout, H//2, W//2).

    compute_dtype: MXU matmul operand dtype.  Defaults to bf16 when x is bf16
    (end-to-end bf16 activations), float32 otherwise.
    out_dtype: output dtype, defaults to x's dtype.
    """
    N, Cin, H, W = x_nchw.shape
    assert H % 2 == 0 and W % 2 == 0, "AvgPool2d(2,2) path requires even H, W"
    if conv_w.ndim == 4:
        conv_w = conv_w.reshape(conv_w.shape[0], conv_w.shape[1])
    Cout = conv_w.shape[0]
    Ho, Wo = H // 2, W // 2
    HW = H * W

    if compute_dtype is None:
        compute_dtype = jnp.bfloat16 if x_nchw.dtype == jnp.bfloat16 else jnp.float32
    if out_dtype is None:
        out_dtype = x_nchw.dtype

    # BN (inference) folded to per-channel scale/shift, kept f32, one operand.
    inv_std = 1.0 / jnp.sqrt(running_var.astype(jnp.float32) + eps)
    scale = gamma.astype(jnp.float32) * inv_std
    shift = beta.astype(jnp.float32) - running_mean.astype(jnp.float32) * scale
    bn = jnp.stack([scale, shift]).reshape(2, Cin, 1)

    w_mat = conv_w.astype(compute_dtype)                 # (Cout, Cin)

    # Generation-aware tiling budgets.
    vmem_cap = _vmem_capacity_bytes()
    target_block_bytes = max(2 * 1024 * 1024, vmem_cap // 16)
    TL = _pick_lane_tile(HW, 2 * W, Cin, x_nchw.dtype.itemsize,
                         target_block_bytes)
    TLo = TL // 4
    S = HW // TL                                          # spatial grid steps

    # Free (metadata-only) flatten of the spatial axes.
    x_flat = x_nchw.reshape(N, Cin, HW)

    # Block-diagonal 2x2 avg-pool matrix for one chunk of TL input pixels
    # (= TL/(2W) complete output rows): p2[j, q] = 0.25 iff pixel j of the
    # chunk belongs to pooled output position q of the chunk.
    j = jnp.arange(TL)
    r = j // W                                            # row within chunk
    c = j % W
    q = (r // 2) * Wo + (c // 2)
    p2 = (q[:, None] == jnp.arange(TLo)[None, :]).astype(compute_dtype)
    p2 = p2 * jnp.asarray(0.25, compute_dtype)

    mm_isize = jnp.dtype(compute_dtype).itemsize
    out_isize = jnp.dtype(out_dtype).itemsize
    flops = int(N * S * (2 * Cin * TL * TLo + 2 * Cout * Cin * TLo))
    bytes_accessed = int(N * Cin * HW * x_nchw.dtype.itemsize
                         + N * Cout * Ho * Wo * out_isize
                         + Cout * Cin * mm_isize
                         + TL * TLo * mm_isize
                         + 2 * Cin * 4)
    cost = pl.CostEstimate(flops=flops, transcendentals=0,
                           bytes_accessed=bytes_accessed)

    vmem_limit = int(min(3 * vmem_cap // 4, 96 * 1024 * 1024))

    out_flat = pl.pallas_call(
        _transition_kernel,
        out_shape=jax.ShapeDtypeStruct((N, Cout, Ho * Wo), out_dtype),
        grid_spec=pltpu.PrefetchScalarGridSpec(
            num_scalar_prefetch=0,
            grid=(N, S),
            in_specs=[
                pl.BlockSpec((None, Cin, TL), lambda n, s: (n, 0, s)),   # x chunk
                pl.BlockSpec((Cout, Cin), lambda n, s: (0, 0)),          # conv weight
                pl.BlockSpec((TL, TLo), lambda n, s: (0, 0)),            # pool matrix
                pl.BlockSpec((2, Cin, 1), lambda n, s: (0, 0, 0)),       # BN scale/shift
            ],
            out_specs=pl.BlockSpec((None, Cout, TLo), lambda n, s: (n, 0, s)),
        ),
        compiler_params=pltpu.CompilerParams(
            dimension_semantics=("parallel", "parallel"),
            vmem_limit_bytes=vmem_limit),
        cost_estimate=cost,
    )(x_flat, w_mat, p2, bn)

    return out_flat.reshape(N, Cout, Ho, Wo)


def _reference(x_nchw, conv_w_oi, gamma, beta, mean, var, eps=1e-5):
    # Pure-JAX reference in the module's original op order: BN -> ReLU -> conv -> pool.
    inv_std = 1.0 / jnp.sqrt(var + eps)
    xh = (x_nchw - mean[None, :, None, None]) * inv_std[None, :, None, None]
    xh = xh * gamma[None, :, None, None] + beta[None, :, None, None]
    xh = jnp.maximum(xh, 0.0)
    y = jnp.einsum('nchw,oc->nohw', xh, conv_w_oi)
    N, Co, H, W = y.shape
    return y.reshape(N, Co, H // 2, 2, W // 2, 2).mean(axis=(3, 5))


if __name__ == "__main__":
    key = jax.random.PRNGKey(0)
    N, Cin, H, W = 2, 4, 16, 16
    Cout = 8

    k1, k2, k3, k4, k5, k6 = jax.random.split(key, 6)
    x = jax.random.normal(k1, (N, Cin, H, W), dtype=jnp.float32)
    conv_w = jax.random.normal(k2, (Cout, Cin), dtype=jnp.float32) * 0.1

    # Deterministic, non-trivial BN parameters / running stats.
    gamma = 1.0 + 0.2 * jax.random.normal(k3, (Cin,), dtype=jnp.float32)
    beta = 0.1 * jax.random.normal(k4, (Cin,), dtype=jnp.float32)
    running_mean = 0.1 * jax.random.normal(k5, (Cin,), dtype=jnp.float32)
    running_var = jax.random.uniform(k6, (Cin,), minval=0.5, maxval=1.5,
                                     dtype=jnp.float32)

    ref = _reference(x, conv_w, gamma, beta, running_mean, running_var)

    # f32 path (compute_dtype defaults to f32 for f32 inputs).
    out = jax.block_until_ready(
        transition_layer(x, conv_w, gamma, beta, running_mean, running_var))
    assert out.shape == (N, Cout, H // 2, W // 2), out.shape
    assert jnp.allclose(out, ref, atol=1e-4, rtol=1e-4), float(
        jnp.max(jnp.abs(out - ref)))

    # End-to-end bf16 path: bf16 activations in, bf16 matmuls (f32 accum),
    # bf16 out; looser tolerance.
    x_bf16 = x.astype(jnp.bfloat16)
    out_bf16 = jax.block_until_ready(
        transition_layer(x_bf16, conv_w, gamma, beta, running_mean,
                         running_var))
    assert out_bf16.dtype == jnp.bfloat16
    assert jnp.allclose(out_bf16.astype(jnp.float32), ref,
                        atol=5e-2, rtol=5e-2), float(
        jnp.max(jnp.abs(out_bf16.astype(jnp.float32) - ref)))

    print("KERNEL_OK")
</pallas_src>

<mosaic_0001>
module attributes {stable_mosaic.version = 11 : i64} {
  func.func @_transition_kernel(%arg0: i32, %arg1: i32, %arg2: memref<1x4x256xf32, #tpu.memory_space<vmem>>, %arg3: memref<8x4xf32, #tpu.memory_space<vmem>>, %arg4: memref<256x64xf32, #tpu.memory_space<vmem>>, %arg5: memref<2x4x1xf32, #tpu.memory_space<vmem>>, %arg6: memref<1x8x64xf32, #tpu.memory_space<vmem>>) attributes {dimension_semantics = [#tpu.dimension_semantics<parallel>, #tpu.dimension_semantics<parallel>], iteration_bounds = array<i64: 2, 1>, scalar_prefetch = 0 : i64, scratch_operands = 0 : i64, tpu.core_type = #tpu.core_type<tc>, window_params = [{transform_indices = @transform_0, window_bounds = array<i64: 1, 4, 256>}, {pipeline_mode = #tpu.pipeline_mode<synchronous>, transform_indices = @transform_1, window_bounds = array<i64: 8, 4>}, {pipeline_mode = #tpu.pipeline_mode<synchronous>, transform_indices = @transform_2, window_bounds = array<i64: 256, 64>}, {pipeline_mode = #tpu.pipeline_mode<synchronous>, transform_indices = @transform_3, window_bounds = array<i64: 2, 4, 1>}, {transform_indices = @transform_4, window_bounds = array<i64: 1, 8, 64>}]} {
    %c0 = arith.constant 0 : index
    %c0_0 = arith.constant 0 : index
    %c0_1 = arith.constant 0 : index
    %0 = vector.load %arg5[%c0, %c0_0, %c0_1] : memref<2x4x1xf32, #tpu.memory_space<vmem>>, vector<1x4x1xf32>
    %1 = vector.shape_cast %0 : vector<1x4x1xf32> to vector<4x1xf32>
    %c1 = arith.constant 1 : index
    %c0_2 = arith.constant 0 : index
    %c0_3 = arith.constant 0 : index
    %2 = vector.load %arg5[%c1, %c0_2, %c0_3] : memref<2x4x1xf32, #tpu.memory_space<vmem>>, vector<1x4x1xf32>
    %3 = vector.shape_cast %2 : vector<1x4x1xf32> to vector<4x1xf32>
    %c0_4 = arith.constant 0 : index
    %c0_5 = arith.constant 0 : index
    %c0_6 = arith.constant 0 : index
    %4 = vector.load %arg2[%c0_4, %c0_5, %c0_6] : memref<1x4x256xf32, #tpu.memory_space<vmem>>, vector<1x4x256xf32>
    %5 = vector.shape_cast %4 : vector<1x4x256xf32> to vector<4x256xf32>
    %6 = vector.broadcast %1 : vector<4x1xf32> to vector<4x256xf32>
    %7 = arith.mulf %5, %6 : vector<4x256xf32>
    %8 = vector.broadcast %3 : vector<4x1xf32> to vector<4x256xf32>
    %9 = arith.addf %7, %8 : vector<4x256xf32>
    %cst = arith.constant 0.000000e+00 : f32
    %10 = vector.broadcast %cst : f32 to vector<4x256xf32>
    %11 = arith.maximumf %9, %10 : vector<4x256xf32>
    %c0_7 = arith.constant 0 : index
    %c0_8 = arith.constant 0 : index
    %12 = vector.load %arg4[%c0_7, %c0_8] : memref<256x64xf32, #tpu.memory_space<vmem>>, vector<256x64xf32>
    %cst_9 = arith.constant dense<0.000000e+00> : vector<4x64xf32>
    %13 = tpu.matmul %11, %12, %cst_9 {dimension_numbers = #tpu.dot_dimension_numbers<[1], [0], [0], [1], [0, 0, 1, 1], [], []>} : vector<4x256xf32>, vector<256x64xf32>, vector<4x64xf32> -> vector<4x64xf32>
    %c0_10 = arith.constant 0 : index
    %c0_11 = arith.constant 0 : index
    %14 = vector.load %arg3[%c0_10, %c0_11] : memref<8x4xf32, #tpu.memory_space<vmem>>, vector<8x4xf32>
    %cst_12 = arith.constant dense<0.000000e+00> : vector<8x64xf32>
    %15 = tpu.matmul %14, %13, %cst_12 {dimension_numbers = #tpu.dot_dimension_numbers<[1], [0], [0], [1], [0, 0, 1, 1], [], []>} : vector<8x4xf32>, vector<4x64xf32>, vector<8x64xf32> -> vector<8x64xf32>
    %c0_13 = arith.constant 0 : index
    %c0_14 = arith.constant 0 : index
    %c0_15 = arith.constant 0 : index
    %16 = vector.load %arg6[%c0_13, %c0_14, %c0_15] : memref<1x8x64xf32, #tpu.memory_space<vmem>>, vector<1x8x64xf32>
    %17 = vector.shape_cast %16 : vector<1x8x64xf32> to vector<8x64xf32>
    %18 = vector.shape_cast %15 : vector<8x64xf32> to vector<1x8x64xf32>
    tpu.vector_store %arg6[%c0_13, %c0_14, %c0_15], %18 {strides = array<i32>} : memref<1x8x64xf32, #tpu.memory_space<vmem>>, vector<1x8x64xf32>,
    return
  }
  func.func @transform_0(%arg0: i32, %arg1: i32) -> (i32, i32, i32) {
    %c0_i32 = arith.constant 0 : i32
    %c0_i32_0 = arith.constant 0 : i32
    return %arg0, %c0_i32, %arg1 : i32, i32, i32
  }
  func.func @transform_1(%arg0: i32, %arg1: i32) -> (i32, i32) {
    %c0_i32 = arith.constant 0 : i32
    %c0_i32_0 = arith.constant 0 : i32
    %c0_i32_1 = arith.constant 0 : i32
    return %c0_i32, %c0_i32_0 : i32, i32
  }
  func.func @transform_2(%arg0: i32, %arg1: i32) -> (i32, i32) {
    %c0_i32 = arith.constant 0 : i32
    %c0_i32_0 = arith.constant 0 : i32
    %c0_i32_1 = arith.constant 0 : i32
    return %c0_i32, %c0_i32_0 : i32, i32
  }
  func.func @transform_3(%arg0: i32, %arg1: i32) -> (i32, i32, i32) {
    %c0_i32 = arith.constant 0 : i32
    %c0_i32_0 = arith.constant 0 : i32
    %c0_i32_1 = arith.constant 0 : i32
    %c0_i32_2 = arith.constant 0 : i32
    return %c0_i32, %c0_i32_0, %c0_i32_1 : i32, i32, i32
  }
  func.func @transform_4(%arg0: i32, %arg1: i32) -> (i32, i32, i32) {
    %c0_i32 = arith.constant 0 : i32
    %c0_i32_0 = arith.constant 0 : i32
    return %arg0, %c0_i32, %arg1 : i32, i32, i32
  }
}

</mosaic_0001>

<llo_original>
// kernel: tpu_custom_call.1
$region0: #{tpu_custom_call.1}
  #allocation0 [shape = 'u32[]', space=smem, size = 0x4, offset = 0x4, fixed_abs, tag = 'smem constant byte address 0x4 - core index']
  #allocation1 [shape = 'u32[72,128]{1,0:T(1,128)}', space=vmem, size = 0x9000, scoped, tag = 'internal scratch']
  %s0 = inlined_call_operand.vmem [shape: f32[2,4,256], index: 0, kind: input, shape index: {}]
  %s1 = inlined_call_operand.vmem [shape: f32[8,4], index: 1, kind: input, shape index: {}]
  %s2 = inlined_call_operand.vmem [shape: f32[256,64], index: 2, kind: input, shape index: {}]
  %s3 = inlined_call_operand.vmem [shape: f32[2,4,1], index: 3, kind: input, shape index: {}]
  %s4 = inlined_call_operand.hbm [shape: f32[2,8,64], index: 4, kind: output, shape index: {}]
  %s5 = sld [smem:[#allocation0]]
  $region49: #{tpu_custom_call.1} parent=0
    _
  %s7 = ssub.s32 1, %s5
  %s8 = scalar_select 0, %s7, %s5
  $region1: #{tpu_custom_call.1} parent=0
    #allocation2 [shape = 'u8[8192]{0}', space=vmem, size = 0x2000, scoped, tag = 'output window, operand 0']
    #allocation3 [shape = 's32[2]{0}', space=sflag, size = 0x8, scoped, tag = 'scoped memory for tpu_custom_call.1']
    %9 = vsyncpa [#allocation3], 0
    %s10 = scalar_lea.sflag [#allocation3], 1
    %11 = vsyncpa %s10, 0
    loop: start=0, step=1, limit=4
    $region2: #{tpu_custom_call.1} parent=1 // loop_pre_header
      _
    $region3: #{tpu_custom_call.1} parent=1 // loop_header
      %s13 = sphi 0, %s17
      %p14 = scmp.ge.s32.totalorder %s13, 4
      %s20 = sphi 0, %s32
      %s21 = sphi 0, %s28
      %s22 = sphi 0, %s20
      %s23 = sphi 0, %s21
      %s24 = sphi 0, %s22
      %s25 = sphi 0, %s23
      %s37 = sphi 0, %s39
      %s40 = sphi 0, %s37
      %s41 = sphi 0, %s40
      %s57 = sphi 0, %s41
      %s61 = sphi 0, %s61
      %s63 = sphi 0, %s61
      %s64 = sphi 0, %s63
      %s78 = sphi 0, %s64
      %s82 = sphi 0, %s82
      %s84 = sphi 0, %s82
      %s85 = sphi 0, %s84
      %s99 = sphi 0, %s85
      %s103 = sphi 0, %s103
      %s105 = sphi 0, %s103
      %s106 = sphi 0, %s105
      %s120 = sphi 0, %s106
      %s128 = sphi 0, %s130
      %s131 = sphi 0, %s128
      %s132 = sphi 0, %s131
      %s148 = sphi 0, %s132
    $region4: #{tpu_custom_call.1} parent=1 // loop_header_branch
      %16 = sbr.rel (%p14) target = $region8
    $region5: #{tpu_custom_call.1} parent=1 // loop_body
      %s18 = ssub.s32 %s13, 1
      %s19 = ssub.s32 %s13, 2
      %s26 = sadd.s32 1, %s21
      %p27 = scmp.ge.s32.totalorder %s26, 1
      %s28 = scalar_select %p27, 0, %s26
      %s29 = sadd.s32 1, %s20
      %s30 = scalar_select %p27, %s29, %s20
      %p31 = scmp.ge.s32.totalorder %s30, 2
      %s32 = scalar_select %p31, 0, %s30
      %s33 = ssub.s32 %s20, %s32
      %s34 = ssub.s32 %s21, %s28
      %s35 = sor.u32 %s33, %s34
      %p36 = scmp.eq.s32.totalorder %s35, 0
      %s38 = sadd.s32 %s37, 1
      %s39 = scalar_select %p36, %s37, %s38
      %p42 = pneg %p36
      %p43 = scmp.eq.s32.totalorder %s13, 1
      %p44 = por %p42, %p43
      %p45 = scmp.ne.s32.totalorder %s37, %s40
      %p46 = scmp.eq.s32.totalorder %s13, 0
      %p47 = por %p45, %p46
      %p48 = scmp.ne.s32.totalorder %s37, %s40
      %p49 = scmp.eq.s32.totalorder %s18, 1
      %p50 = por %p48, %p49
      %p51 = scmp.ne.s32.totalorder %s40, %s41
      %p52 = scmp.eq.s32.totalorder %s18, 0
      %p53 = por %p51, %p52
      %p54 = scmp.ne.s32.totalorder %s40, %s41
      %p55 = scmp.eq.s32.totalorder %s19, 1
      %p56 = por %p54, %p55
      %p58 = scmp.ne.s32.totalorder %s41, %s57
      %p59 = scmp.eq.s32.totalorder %s19, 0
      %p60 = por %p58, %p59
      %s62 = sadd.s32 %s61, 1
      %p65 = scmp.eq.s32.totalorder %s13, 1
      %p66 = scmp.ne.s32.totalorder %s61, %s63
      %p67 = scmp.eq.s32.totalorder %s13, 0
      %p68 = por %p66, %p67
      %p69 = scmp.ne.s32.totalorder %s61, %s63
      %p70 = scmp.eq.s32.totalorder %s18, 1
      %p71 = por %p69, %p70
      %p72 = scmp.ne.s32.totalorder %s63, %s64
      %p73 = scmp.eq.s32.totalorder %s18, 0
      %p74 = por %p72, %p73
      %p75 = scmp.ne.s32.totalorder %s63, %s64
      %p76 = scmp.eq.s32.totalorder %s19, 1
      %p77 = por %p75, %p76
      %p79 = scmp.ne.s32.totalorder %s64, %s78
      %p80 = scmp.eq.s32.totalorder %s19, 0
      %p81 = por %p79, %p80
      %s83 = sadd.s32 %s82, 1
      %p86 = scmp.eq.s32.totalorder %s13, 1
      %p87 = scmp.ne.s32.totalorder %s82, %s84
      %p88 = scmp.eq.s32.totalorder %s13, 0
      %p89 = por %p87, %p88
      %p90 = scmp.ne.s32.totalorder %s82, %s84
      %p91 = scmp.eq.s32.totalorder %s18, 1
      %p92 = por %p90, %p91
      %p93 = scmp.ne.s32.totalorder %s84, %s85
      %p94 = scmp.eq.s32.totalorder %s18, 0
      %p95 = por %p93, %p94
      %p96 = scmp.ne.s32.totalorder %s84, %s85
      %p97 = scmp.eq.s32.totalorder %s19, 1
      %p98 = por %p96, %p97
      %p100 = scmp.ne.s32.totalorder %s85, %s99
      %p101 = scmp.eq.s32.totalorder %s19, 0
      %p102 = por %p100, %p101
      %s104 = sadd.s32 %s103, 1
      %p107 = scmp.eq.s32.totalorder %s13, 1
      %p108 = scmp.ne.s32.totalorder %s103, %s105
      %p109 = scmp.eq.s32.totalorder %s13, 0
      %p110 = por %p108, %p109
      %p111 = scmp.ne.s32.totalorder %s103, %s105
      %p112 = scmp.eq.s32.totalorder %s18, 1
      %p113 = por %p111, %p112
      %p114 = scmp.ne.s32.totalorder %s105, %s106
      %p115 = scmp.eq.s32.totalorder %s18, 0
      %p116 = por %p114, %p115
      %p117 = scmp.ne.s32.totalorder %s105, %s106
      %p118 = scmp.eq.s32.totalorder %s19, 1
      %p119 = por %p117, %p118
      %p121 = scmp.ne.s32.totalorder %s106, %s120
      %p122 = scmp.eq.s32.totalorder %s19, 0
      %p123 = por %p121, %p122
      %s124 = ssub.s32 %s20, %s32
      %s125 = ssub.s32 %s21, %s28
      %s126 = sor.u32 %s124, %s125
      %p127 = scmp.eq.s32.totalorder %s126, 0
      %s129 = sadd.s32 %s128, 1
      %s130 = scalar_select %p127, %s128, %s129
      %p133 = pneg %p127
      %p134 = scmp.eq.s32.totalorder %s13, 1
      %p135 = por %p133, %p134
      %p136 = scmp.ne.s32.totalorder %s128, %s131
      %p137 = scmp.eq.s32.totalorder %s13, 0
      %p138 = por %p136, %p137
      %p139 = scmp.ne.s32.totalorder %s128, %s131
      %p140 = scmp.eq.s32.totalorder %s18, 1
      %p141 = por %p139, %p140
      %p142 = scmp.ne.s32.totalorder %s131, %s132
      %p143 = scmp.eq.s32.totalorder %s18, 0
      %p144 = por %p142, %p143
      %p145 = scmp.ne.s32.totalorder %s131, %s132
      %p146 = scmp.eq.s32.totalorder %s19, 1
      %p147 = por %p145, %p146
      %p149 = scmp.ne.s32.totalorder %s132, %s148
      %p150 = scmp.eq.s32.totalorder %s19, 0
      %p151 = por %p149, %p150
      %p152 = scmp.le.s32.totalorder 1, %s13
      %p153 = scmp.lt.s32.totalorder %s13, 3
      %p154 = pnand %p152, %p153
      %p155 = pneg %p154
      // Predicated region
      $region9: #{tpu_custom_call.1} parent=5 // pred_check
        _
      $region10: #{tpu_custom_call.1} parent=5 // pred_check_branch
        %157 = sbr.rel (%p154) target = $region12
      $region11: #{tpu_custom_call.1} parent=5 // pred_region
        %s158 = ssub.s32 %s13, 1
        // Predicated region
        $region13: #{tpu_custom_call.1} parent=11 // pred_check
          %p159 = pneg %p74
        $region14: #{tpu_custom_call.1} parent=11 // pred_check_branch
          %161 = sbr.rel (%p159) target = $region16
        $region15: #{tpu_custom_call.1} parent=11 // pred_region
          _
        $region16: #{tpu_custom_call.1} parent=11 // pred_fallthru
          _
        // Predicated region
        $region17: #{tpu_custom_call.1} parent=11 // pred_check
          %p162 = pneg %p95
        $region18: #{tpu_custom_call.1} parent=11 // pred_check_branch
          %164 = sbr.rel (%p162) target = $region20
        $region19: #{tpu_custom_call.1} parent=11 // pred_region
          _
        $region20: #{tpu_custom_call.1} parent=11 // pred_fallthru
          _
        // Predicated region
        $region21: #{tpu_custom_call.1} parent=11 // pred_check
          %p165 = pneg %p116
        $region22: #{tpu_custom_call.1} parent=11 // pred_check_branch
          %167 = sbr.rel (%p165) target = $region24
        $region23: #{tpu_custom_call.1} parent=11 // pred_region
          _
        $region24: #{tpu_custom_call.1} parent=11 // pred_fallthru
          _
      $region12: #{tpu_custom_call.1} parent=5 // pred_fallthru
        _
      %p168 = scmp.lt.s32.totalorder %s13, 2
      // Predicated region
      $region25: #{tpu_custom_call.1} parent=5 // pred_check
        %p169 = pneg %p168
      $region26: #{tpu_custom_call.1} parent=5 // pred_check_branch
        %171 = sbr.rel (%p169) target = $region28
      $region27: #{tpu_custom_call.1} parent=5 // pred_region
        // Predicated region
        $region29: #{tpu_custom_call.1} parent=27 // pred_check
          %p172 = pneg %p47
        $region30: #{tpu_custom_call.1} parent=27 // pred_check_branch
          %174 = sbr.rel (%p172) target = $region32
        $region31: #{tpu_custom_call.1} parent=27 // pred_region
          %s175 = smul.u32 2, %s21
          %p176 = scmp.lt.s32.totalorder %s20, 1
          %s177 = scalar_select %p176, %s20, 1
          %p178 = scmp.lt.s32.totalorder %s175, 1
          %s179 = scalar_select %p178, %s175, 1
          %s180 = smul.addr %s177, 2
          %s181 = sadd.s32 %s179, %s180
          %s182 = smul.addr %s181, 4
          %s183 = scalar_lea.vmem %s0, %s182
          %s184 = smul.u32 2, %s21
        $region32: #{tpu_custom_call.1} parent=27 // pred_fallthru
          _
      $region28: #{tpu_custom_call.1} parent=5 // pred_fallthru
        _
      %p185 = scmp.le.s32.totalorder 1, %s13
      %p186 = scmp.lt.s32.totalorder %s13, 3
      %p187 = pnand %p185, %p186
      %p188 = pneg %p187
      // Predicated region
      $region33: #{tpu_custom_call.1} parent=5 // pred_check
        _
      $region34: #{tpu_custom_call.1} parent=5 // pred_check_branch
        %190 = sbr.rel (%p187) target = $region36
      $region35: #{tpu_custom_call.1} parent=5 // pred_region
        %s191 = ssub.s32 %s13, 1
        %s192 = smul.u32 2, %s23
        %p193 = scmp.lt.s32.totalorder %s22, 1
        %s194 = scalar_select %p193, %s22, 1
        %p195 = scmp.lt.s32.totalorder %s192, 1
        %s196 = scalar_select %p195, %s192, 1
        %s197 = smul.addr %s194, 2
        %s198 = sadd.s32 %s196, %s197
        %s199 = smul.addr %s198, 4
        %s200 = scalar_lea.vmem %s0, %s199
        %p201 = pneg %p53
        %p202 = pneg %p50
        %p203 = pneg %p74
        %p204 = pneg %p71
        %p205 = pneg %p95
        %p206 = pneg %p92
        %p207 = pneg %p116
        %p208 = pneg %p113
        %p209 = pneg %p144
        %p210 = pneg %p141
        %s211 = sand.u32 %s131, 1
        %s212 = scalar_lea.sflag [#allocation3], %s211
        %s213 = sand.u32 %s131, 1
        %s214 = smul.addr %s213, 8
        %s215 = scalar_lea.vmem [#allocation2], %s214
        %s216 = smul.u32 2, %s23
        %p217 = scmp.lt.s32.totalorder %s22, 1
        %s218 = scalar_select %p217, %s22, 1
        %p219 = scmp.lt.s32.totalorder %s216, 1
        %s220 = scalar_select %p219, %s216, 1
        %s221 = smul.addr %s218, 2
        %s222 = sadd.s32 %s220, %s221
        %s223 = smul.addr %s222, 4
        %s224 = scalar_lea.vmem %s0, %s223
        %s225 = smul.u32 2, %s23
        %v226 = vld [vmem:[%s3] sm:$0xf]
        %s227 = scalar_lea.vmem %s3, 4
        %v228 = vld [vmem:[%s227] sm:$0xf]
        %v229 = vld [vmem:[%s224] sm:$0xff]
        %231 = vset.pattern.permute.xlu0 0
        %232 = vperm.xlu0 %231, %v226
        %v233 = vpop.permute.xlu0 %232
        %v235 = vunpack.c.l.s4 839922192
        %v236 = vunpack.c.0.s8 %v235
        %v237 = vperm.slane %v233, %v236
        %v239 = vmul.f32 %v229, %v237
        %241 = vset.pattern.permute.xlu0 0
        %242 = vperm.xlu0 %241, %v228
        %v243 = vpop.permute.xlu0 %242
        %v245 = vunpack.c.l.s4 839922192
        %v246 = vunpack.c.0.s8 %v245
        %v247 = vperm.slane %v243, %v246
        %v249 = vadd.f32 %v239, %v247
        %v250 = vmax.f32 %v249, 0.0
        %v251 = vld [vmem:[%s2] sm:$0xff]
        %v252 = vld [vmem:[%s2 + $0x8] sm:$0xff]
        %v253 = vld [vmem:[%s2 + $0x10] sm:$0xff]
        %v254 = vld [vmem:[%s2 + $0x18] sm:$0xff]
        %v255 = vld [vmem:[%s2 + $0x20] sm:$0xff]
        %v256 = vld [vmem:[%s2 + $0x28] sm:$0xff]
        %v257 = vld [vmem:[%s2 + $0x30] sm:$0xff]
        %v258 = vld [vmem:[%s2 + $0x38] sm:$0xff]
        %v259 = vld [vmem:[%s2 + $0x40] sm:$0xff]
        %v260 = vld [vmem:[%s2 + $0x48] sm:$0xff]
        %v261 = vld [vmem:[%s2 + $0x50] sm:$0xff]
        %v262 = vld [vmem:[%s2 + $0x58] sm:$0xff]
        %v263 = vld [vmem:[%s2 + $0x60] sm:$0xff]
        %v264 = vld [vmem:[%s2 + $0x68] sm:$0xff]
        %v265 = vld [vmem:[%s2 + $0x70] sm:$0xff]
        %v266 = vld [vmem:[%s2 + $0x78] sm:$0xff]
        %v267 = vld [vmem:[%s2 + $0x80] sm:$0xff]
        %v268 = vld [vmem:[%s2 + $0x88] sm:$0xff]
        %v269 = vld [vmem:[%s2 + $0x90] sm:$0xff]
        %v270 = vld [vmem:[%s2 + $0x98] sm:$0xff]
        %v271 = vld [vmem:[%s2 + $0xa0] sm:$0xff]
        %v272 = vld [vmem:[%s2 + $0xa8] sm:$0xff]
        %v273 = vld [vmem:[%s2 + $0xb0] sm:$0xff]
        %v274 = vld [vmem:[%s2 + $0xb8] sm:$0xff]
        %v275 = vld [vmem:[%s2 + $0xc0] sm:$0xff]
        %v276 = vld [vmem:[%s2 + $0xc8] sm:$0xff]
        %v277 = vld [vmem:[%s2 + $0xd0] sm:$0xff]
        %v278 = vld [vmem:[%s2 + $0xd8] sm:$0xff]
        %v279 = vld [vmem:[%s2 + $0xe0] sm:$0xff]
        %v280 = vld [vmem:[%s2 + $0xe8] sm:$0xff]
        %v281 = vld [vmem:[%s2 + $0xf0] sm:$0xff]
        %v282 = vld [vmem:[%s2 + $0xf8] sm:$0xff]
        %284 = vst [vmem:[#allocation1] ss:$2 sm:$0xff] %v250
        %v285 = vld.sshfl [vmem:[#allocation1] sm:$0xff pattern:$0x75316420]
        %v286 = vld.sshfl [vmem:[#allocation1 + $0x8] sm:$0xff pattern:$0x75316420]
        %289 = vmatpush.msra.mxu0 %v266
        %290 = vmatpush.msra.mxu0 %v265
        %291 = vmatpush.msra.mxu0 %v264
        %292 = vmatpush.msra.mxu0 %v263
        %293 = vmatpush.msra.mxu0 %v262
        %294 = vmatpush.msra.mxu0 %v261
        %295 = vmatpush.msra.mxu0 %v260
        %296 = vmatpush.msra.mxu0 %v259
        %297 = vmatpush.msra.mxu0 %v258
        %298 = vmatpush.msra.mxu0 %v257
        %299 = vmatpush.msra.mxu0 %v256
        %300 = vmatpush.msra.mxu0 %v255
        %301 = vmatpush.msra.mxu0 %v254
        %302 = vmatpush.msra.mxu0 %v253
        %303 = vmatpush.msra.mxu0 %v252
        %304 = vmatpush.msra.mxu0 %v251
        %305 = vmatmul.f32.gmra.mxu0 %v285
        %v306 = vpop.f32.mrf.mxu0
        %v307 = vadd.f32 0.0, %v306
        %308 = vdwg.mxu0
        %309 = vmatpush.msra.mxu0 %v282
        %310 = vmatpush.msra.mxu0 %v281
        %311 = vmatpush.msra.mxu0 %v280
        %312 = vmatpush.msra.mxu0 %v279
        %313 = vmatpush.msra.mxu0 %v278
        %314 = vmatpush.msra.mxu0 %v277
        %315 = vmatpush.msra.mxu0 %v276
        %316 = vmatpush.msra.mxu0 %v275
        %317 = vmatpush.msra.mxu0 %v274
        %318 = vmatpush.msra.mxu0 %v273
        %319 = vmatpush.msra.mxu0 %v272
        %320 = vmatpush.msra.mxu0 %v271
        %321 = vmatpush.msra.mxu0 %v270
        %322 = vmatpush.msra.mxu0 %v269
        %323 = vmatpush.msra.mxu0 %v268
        %324 = vmatpush.msra.mxu0 %v267
        %325 = vmatmul.f32.gmra.mxu0 %v286
        %v326 = vpop.f32.mrf.mxu0
        %v327 = vadd.f32 %v307, %v326
        %328 = vdwg.mxu0
        %v329 = vld [vmem:[%s1] sm:$0xff]
        %vm330 = vcmask 31744
        %v332 = vsel %vm330, %v329, 0
        %vm334 = vcmask 1043456
        %v336 = vsel %vm334, %v327, 0
        %338 = vmatpush.msra.mxu0 0.0
        %339 = vmatpush.msra.mxu0 0.0
        %340 = vmatpush.msra.mxu0 0.0
        %341 = vmatpush.msra.mxu0 0.0
        %342 = vmatpush.msra.mxu0 0.0
        %343 = vmatpush.msra.mxu0 0.0
        %344 = vmatpush.msra.mxu0 0.0
        %345 = vmatpush.msra.mxu0 0.0
        %346 = vmatpush.msra.mxu0 0.0
        %347 = vmatpush.msra.mxu0 0.0
        %348 = vmatpush.msra.mxu0 0.0
        %349 = vmatpush.msra.mxu0 0.0
        %350 = vmatpush.msra.mxu0 0.0
        %351 = vmatpush.msra.mxu0 0.0
        %352 = vmatpush.msra.mxu0 0.0
        %353 = vmatpush.msra.mxu0 %v336
        %354 = vmatmul.f32.gmra.mxu0 %v332
        %v355 = vpop.f32.mrf.mxu0
        %v356 = vadd.f32 0.0, %v355
        %357 = vdwg.mxu0
        %vm358 = vcmask 523264
        %359 = vst.msk [vmem:[%s215] sm:$0xff] %vm358, %v356
        %s360 = sand.u32 %s131, 1
        %s361 = scalar_lea.sflag [#allocation3], %s360
        %s362 = sand.u32 %s131, 1
        %s363 = smul.addr %s362, 8
        %s364 = scalar_lea.vmem [#allocation2], %s363
        // Predicated region
        $region37: #{tpu_custom_call.1} parent=35 // pred_check
          %p365 = pneg %p141
        $region38: #{tpu_custom_call.1} parent=35 // pred_check_branch
          %367 = sbr.rel (%p365) target = $region40
        $region39: #{tpu_custom_call.1} parent=35 // pred_region
          %369 = vsyncadd %s361, 0
          %s370 = sadd.s32 %s23, %s22
          %s371 = smul.addr %s370, 8
          %s372 = scalar_lea.hbm %s4, %s371
          %s374 = sshll.u32 %s364, 4
          %s375 = int_to_ptr.vmem [resolvable:$true] %s374
          %s376 = sshll.u32 %s372, 4
          %s377 = int_to_ptr.hbm [resolvable:$true] %s376
          %379 = dma.vmem_to_hbm [thread:$0]  %s375, 128, %s377, %s361
        $region40: #{tpu_custom_call.1} parent=35 // pred_fallthru
          _
      $region36: #{tpu_custom_call.1} parent=5 // pred_fallthru
        _
      %p380 = scmp.le.s32.totalorder 2, %s13
      // Predicated region
      $region41: #{tpu_custom_call.1} parent=5 // pred_check
        %p381 = pneg %p380
      $region42: #{tpu_custom_call.1} parent=5 // pred_check_branch
        %383 = sbr.rel (%p381) target = $region44
      $region43: #{tpu_custom_call.1} parent=5 // pred_region
        %s384 = ssub.s32 %s13, 2
        // Predicated region
        $region45: #{tpu_custom_call.1} parent=43 // pred_check
          %p385 = pneg %p147
        $region46: #{tpu_custom_call.1} parent=43 // pred_check_branch
          %387 = sbr.rel (%p385) target = $region48
        $region47: #{tpu_custom_call.1} parent=43 // pred_region
          %s388 = sand.u32 %s132, 1
          %s389 = scalar_lea.sflag [#allocation3], %s388
          %s390 = sand.u32 %s132, 1
          %s391 = smul.addr %s390, 8
          %s392 = scalar_lea.vmem [#allocation2], %s391
          %394 = dma.done %s389, 128
        $region48: #{tpu_custom_call.1} parent=43 // pred_fallthru
          _
      $region44: #{tpu_custom_call.1} parent=5 // pred_fallthru
        _
    $region6: #{tpu_custom_call.1} parent=1 // loop_footer
      %s17 = sadd.s32 1, %s13
    $region7: #{tpu_custom_call.1} parent=1 // loop_footer_branch
      %12 = sbr.rel target = $region3
    $region8: #{tpu_custom_call.1} parent=1 // loop_exit
      _
    %395 = vsyncpa [#allocation3], 1
    %s396 = scalar_lea.sflag [#allocation3], 1
    %397 = vsyncpa %s396, 1

</llo_original>
